<compile_context>
chip_gen: v7x
topology: tpu7x:2x2x1
jax: 0.10.0
libtpu: 0.0.40
codegen_flags: <defaults>
</compile_context>

<pallas_src>
import jax
import jax.numpy as jnp
from jax.experimental import pallas as pl
from jax.experimental.pallas import tpu as pltpu

_LANE = 128
_SUBLANE = 8


def _round_up(v, m):
    return (v + m - 1) // m * m


def _cdiv(a, b):
    return -(-a // b)


# --------------------------------------------------------------------------
# Kernel
# --------------------------------------------------------------------------
def _mlp_kernel(x_ref,
                w0_ref, b0_ref,
                w1_ref, b1_ref,
                w2_ref, b2_ref,
                w3_ref, b3_ref,
                w4_ref, b4_ref,
                w5_ref, b5_ref,
                out_ref):
    """Fused 6-layer MLP forward for one batch tile.

    Matmuls run on the MXU with bf16 operands and f32 accumulation; the
    bias-add / ReLU epilogue runs on the VPU in f32 (portable to v5e, which
    has no bf16 VPU).  Dropout(p=0) is the identity and is elided.
    """

    def layer(h_bf16, w_ref, b_ref, relu):
        acc = jnp.dot(h_bf16, w_ref[...], preferred_element_type=jnp.float32)
        acc = acc + b_ref[...]
        if relu:
            acc = jnp.maximum(acc, 0.0)
        return acc

    h = x_ref[...]                                             # already bf16
    h = layer(h, w0_ref, b0_ref, True).astype(jnp.bfloat16)    # input_fc
    h = layer(h, w1_ref, b1_ref, True).astype(jnp.bfloat16)    # hidden1
    h = layer(h, w2_ref, b2_ref, True).astype(jnp.bfloat16)    # hidden2
    h = layer(h, w3_ref, b3_ref, True).astype(jnp.bfloat16)    # hidden3
    h = layer(h, w4_ref, b4_ref, True).astype(jnp.bfloat16)    # hidden4
    y = layer(h, w5_ref, b5_ref, False)                        # output_fc
    out_ref[...] = y.astype(out_ref.dtype)


# --------------------------------------------------------------------------
# One-time parameter preparation (hoisted out of the per-call path)
# --------------------------------------------------------------------------
def prepare_params(params):
    """Pad + cast the 6 (W, b) pairs once (weights -> bf16, biases -> f32).

    params: list of 6 (W, b), W: (in, out) f32 (PyTorch weight transposed so
            y = x @ W + b), b: (1, out) f32.
    Returns (flat_params, sizes) where flat_params is the 12-array tuple the
    kernel consumes and sizes holds the true / padded dims.
    """
    input_size = params[0][0].shape[0]
    hidden_size = params[0][0].shape[1]
    output_size = params[5][0].shape[1]

    in_pad = _round_up(input_size, _LANE)
    hid_pad = _round_up(hidden_size, _LANE)
    out_pad = _round_up(output_size, _LANE)

    padded_dims = [(in_pad, hid_pad)] + [(hid_pad, hid_pad)] * 4 + \
                  [(hid_pad, out_pad)]
    flat = []
    for (w, b), (pi, po) in zip(params, padded_dims):
        if (w.shape[0], w.shape[1]) == (pi, po):
            w_p = w.astype(jnp.bfloat16)
        else:
            w_p = jnp.zeros((pi, po), jnp.bfloat16).at[
                :w.shape[0], :w.shape[1]].set(w.astype(jnp.bfloat16))
        if b.shape[1] == po:
            b_p = b.astype(jnp.float32)
        else:
            b_p = jnp.zeros((1, po), jnp.float32).at[:, :b.shape[1]].set(b)
        flat.extend([w_p, b_p])

    sizes = dict(input_size=input_size, hidden_size=hidden_size,
                 output_size=output_size,
                 in_pad=in_pad, hid_pad=hid_pad, out_pad=out_pad)
    return tuple(flat), sizes


# --------------------------------------------------------------------------
# VMEM budgeting helpers (generation-aware)
# --------------------------------------------------------------------------
def _vmem_cap_bytes():
    """~82% of physical per-core VMEM (52 MiB on v7x, ~105 MiB on v5e/v6e)."""
    try:
        phys = int(pltpu.get_tpu_info().vmem_capacity_bytes)
    except Exception:
        phys = 64 * 2**20   # conservative fallback (v7x per-TC VMEM)
    return int(phys * 0.82)


def _tile_vmem_bytes(bt, in_pad, hid_pad, out_pad, x_buffers):
    return (x_buffers * bt * in_pad * 2      # bf16 x tiles (multi-buffered)
            + 2 * bt * out_pad * 4           # f32 out tiles (double-buffered)
            + 3 * bt * hid_pad * 4)          # live f32 activations / scratch


# --------------------------------------------------------------------------
# Forward wrapper
# --------------------------------------------------------------------------
def network_diff_forward(x, prepared, *, batch_tile=None, x_buffers=2):
    """Fused Network_diff forward as a single Pallas kernel.

    x:        (B, input_size) float32
    prepared: output of prepare_params(params)
    """
    flat_params, sz = prepared
    B, input_size = x.shape
    assert input_size == sz["input_size"]
    in_pad, hid_pad, out_pad = sz["in_pad"], sz["hid_pad"], sz["out_pad"]
    output_size = sz["output_size"]

    # ---- resident (weights + biases) VMEM bytes --------------------------
    weight_bytes = 2 * (in_pad * hid_pad + 4 * hid_pad * hid_pad
                        + hid_pad * out_pad)                  # bf16 weights
    bias_bytes = 4 * (5 * hid_pad + out_pad)                  # f32 biases
    resident = weight_bytes + bias_bytes
    vmem_cap = _vmem_cap_bytes()

    # ---- batch tile selection: fits VMEM, balanced, >=2 steps when useful -
    if batch_tile is None:
        target = _SUBLANE
        for cand in (1024, 512, 256, 128, 64, 32, 16, 8):
            if resident + _tile_vmem_bytes(cand, in_pad, hid_pad, out_pad,
                                           x_buffers) <= vmem_cap:
                target = cand
                break
        n_tiles = max(1, _cdiv(B, target))
        if n_tiles == 1 and B >= 256:
            n_tiles = 2    # let the "parallel" axis split across 2 TCs (v7x)
        batch_tile = _round_up(_cdiv(B, n_tiles), _SUBLANE)
    else:
        batch_tile = _round_up(batch_tile, _SUBLANE)

    # Shrink (never exceed the cap) if the requested tile does not fit.
    while (batch_tile > _SUBLANE and
           resident + _tile_vmem_bytes(batch_tile, in_pad, hid_pad, out_pad,
                                       x_buffers) > vmem_cap):
        batch_tile = _round_up(batch_tile // 2, _SUBLANE)
    # TODO(synk): if resident alone exceeds vmem_cap (very large hidden_size),
    # fall back to per-layer weight streaming instead of a single fused call.

    B_pad = _round_up(B, batch_tile)
    grid = (B_pad // batch_tile,)

    # ---- x: cast to bf16 (fused with pad; skipped if already aligned) ----
    if B_pad == B and in_pad == input_size:
        x_p = x.astype(jnp.bfloat16)
    else:
        x_p = jnp.zeros((B_pad, in_pad), jnp.bfloat16).at[
            :B, :input_size].set(x.astype(jnp.bfloat16))

    # ---- BlockSpecs -------------------------------------------------------
    if x_buffers == 2:
        x_spec = pl.BlockSpec((batch_tile, in_pad), lambda i: (i, 0))
    else:  # e.g. 3-deep buffering if xprof shows exposed DMA at tiny compute
        x_spec = pl.BlockSpec((batch_tile, in_pad), lambda i: (i, 0),
                              pipeline_mode=pl.Buffered(x_buffers))
    out_spec = pl.BlockSpec((batch_tile, out_pad), lambda i: (i, 0))

    def const_spec(shape):
        # Block index never changes across the grid -> single-buffer it.
        return pl.BlockSpec(shape, lambda i: (0, 0),
                            pipeline_mode=pl.Buffered(1))

    in_specs = [x_spec] + [const_spec(p.shape) for p in flat_params]

    # ---- advisory cost estimate (padded = real traffic of this call) ------
    flops = 2 * B_pad * (in_pad * hid_pad + 4 * hid_pad * hid_pad
                         + hid_pad * out_pad)
    bytes_accessed = (2 * B_pad * in_pad            # bf16 x in
                      + 4 * B_pad * out_pad         # f32 out
                      + weight_bytes + bias_bytes)
    cost = pl.CostEstimate(flops=flops, transcendentals=0,
                           bytes_accessed=bytes_accessed)

    vmem_needed = resident + _tile_vmem_bytes(batch_tile, in_pad, hid_pad,
                                              out_pad, x_buffers)
    vmem_limit = int(max(32 * 2**20, min(vmem_cap, int(vmem_needed * 1.3))))

    fn = pl.pallas_call(
        _mlp_kernel,
        out_shape=jax.ShapeDtypeStruct((B_pad, out_pad), x.dtype),
        grid_spec=pltpu.PrefetchScalarGridSpec(
            num_scalar_prefetch=0,
            grid=grid,
            in_specs=in_specs,
            out_specs=out_spec,
        ),
        compiler_params=pltpu.CompilerParams(
            dimension_semantics=("parallel",),
            vmem_limit_bytes=vmem_limit,
        ),
        cost_estimate=cost,
    )
    out_padded = fn(x_p, *flat_params)
    return out_padded[:B, :output_size]


# --------------------------------------------------------------------------
# Parameter init + pure-JAX reference
# --------------------------------------------------------------------------
def init_params(key, input_size, hidden_size, output_size):
    """Deterministic parameter init (Kaiming-uniform-ish, like nn.Linear)."""
    dims = [(input_size, hidden_size)] + \
           [(hidden_size, hidden_size)] * 4 + \
           [(hidden_size, output_size)]
    params = []
    for (fan_in, fan_out) in dims:
        key, kw, kb = jax.random.split(key, 3)
        bound = 1.0 / jnp.sqrt(fan_in)
        w = jax.random.uniform(kw, (fan_in, fan_out), jnp.float32, -bound, bound)
        b = jax.random.uniform(kb, (1, fan_out), jnp.float32, -bound, bound)
        params.append((w, b))
    return params


def reference_forward(x, params):
    """Plain-JAX reference mirroring the kernel's bf16-operand / f32-accumulate
    numerics (operands rounded to bf16, matmul accumulated in f32)."""
    h = x
    for i, (w, b) in enumerate(params):
        h_q = h.astype(jnp.bfloat16).astype(jnp.float32)
        w_q = w.astype(jnp.bfloat16).astype(jnp.float32)
        h = jnp.dot(h_q, w_q, preferred_element_type=jnp.float32) + b
        if i < 5:  # ReLU on all layers except output_fc
            h = jnp.maximum(h, 0.0)
    return h


if __name__ == "__main__":
    # Small shapes consistent with the module's forward: 2D [batch, features].
    input_size = 16
    hidden_size = 32
    output_size = 8

    key = jax.random.PRNGKey(0)
    params = init_params(key, input_size, hidden_size, output_size)
    prepared = prepare_params(params)   # one-time pad + bf16 cast of weights

    # --- small batch (single tile, feature-dim padding path) ---------------
    key, kx = jax.random.split(key)
    x_small = jax.random.normal(kx, (8, input_size), dtype=jnp.float32)
    out_small = jax.block_until_ready(network_diff_forward(x_small, prepared))
    ref_small = reference_forward(x_small, params)
    assert out_small.shape == (8, output_size)
    assert jnp.allclose(out_small, ref_small, atol=2e-4, rtol=2e-4), \
        "mismatch vs reference (small batch)"

    # --- larger batch (balanced 2-tile grid + ragged-batch padding path) ---
    key, kx = jax.random.split(key)
    x_big = jax.random.normal(kx, (300, input_size), dtype=jnp.float32)
    out_big = jax.block_until_ready(network_diff_forward(x_big, prepared))
    ref_big = reference_forward(x_big, params)
    assert out_big.shape == (300, output_size)
    assert jnp.allclose(out_big, ref_big, atol=2e-4, rtol=2e-4), \
        "mismatch vs reference (large batch)"

    print("KERNEL_OK")
</pallas_src>

<mosaic_0001>
module attributes {stable_mosaic.version = 11 : i64} {
  func.func @_mlp_kernel(%arg0: i32, %arg1: memref<8x128xbf16, #tpu.memory_space<vmem>>, %arg2: memref<128x128xbf16, #tpu.memory_space<vmem>>, %arg3: memref<1x128xf32, #tpu.memory_space<vmem>>, %arg4: memref<128x128xbf16, #tpu.memory_space<vmem>>, %arg5: memref<1x128xf32, #tpu.memory_space<vmem>>, %arg6: memref<128x128xbf16, #tpu.memory_space<vmem>>, %arg7: memref<1x128xf32, #tpu.memory_space<vmem>>, %arg8: memref<128x128xbf16, #tpu.memory_space<vmem>>, %arg9: memref<1x128xf32, #tpu.memory_space<vmem>>, %arg10: memref<128x128xbf16, #tpu.memory_space<vmem>>, %arg11: memref<1x128xf32, #tpu.memory_space<vmem>>, %arg12: memref<128x128xbf16, #tpu.memory_space<vmem>>, %arg13: memref<1x128xf32, #tpu.memory_space<vmem>>, %arg14: memref<8x128xf32, #tpu.memory_space<vmem>>) attributes {dimension_semantics = [#tpu.dimension_semantics<parallel>], iteration_bounds = array<i64: 1>, scalar_prefetch = 0 : i64, scratch_operands = 0 : i64, tpu.core_type = #tpu.core_type<tc>, window_params = [{transform_indices = @transform_0, window_bounds = array<i64: 8, 128>}, {pipeline_mode = #tpu.pipeline_mode<synchronous>, transform_indices = @transform_1, window_bounds = array<i64: 128, 128>}, {pipeline_mode = #tpu.pipeline_mode<synchronous>, transform_indices = @transform_2, window_bounds = array<i64: 1, 128>}, {pipeline_mode = #tpu.pipeline_mode<synchronous>, transform_indices = @transform_3, window_bounds = array<i64: 128, 128>}, {pipeline_mode = #tpu.pipeline_mode<synchronous>, transform_indices = @transform_4, window_bounds = array<i64: 1, 128>}, {pipeline_mode = #tpu.pipeline_mode<synchronous>, transform_indices = @transform_5, window_bounds = array<i64: 128, 128>}, {pipeline_mode = #tpu.pipeline_mode<synchronous>, transform_indices = @transform_6, window_bounds = array<i64: 1, 128>}, {pipeline_mode = #tpu.pipeline_mode<synchronous>, transform_indices = @transform_7, window_bounds = array<i64: 128, 128>}, {pipeline_mode = #tpu.pipeline_mode<synchronous>, transform_indices = @transform_8, window_bounds = array<i64: 1, 128>}, {pipeline_mode = #tpu.pipeline_mode<synchronous>, transform_indices = @transform_9, window_bounds = array<i64: 128, 128>}, {pipeline_mode = #tpu.pipeline_mode<synchronous>, transform_indices = @transform_10, window_bounds = array<i64: 1, 128>}, {pipeline_mode = #tpu.pipeline_mode<synchronous>, transform_indices = @transform_11, window_bounds = array<i64: 128, 128>}, {pipeline_mode = #tpu.pipeline_mode<synchronous>, transform_indices = @transform_12, window_bounds = array<i64: 1, 128>}, {transform_indices = @transform_13, window_bounds = array<i64: 8, 128>}]} {
    %c0 = arith.constant 0 : index
    %c0_0 = arith.constant 0 : index
    %0 = vector.load %arg1[%c0, %c0_0] : memref<8x128xbf16, #tpu.memory_space<vmem>>, vector<8x128xbf16>
    %c0_1 = arith.constant 0 : index
    %c0_2 = arith.constant 0 : index
    %1 = vector.load %arg2[%c0_1, %c0_2] : memref<128x128xbf16, #tpu.memory_space<vmem>>, vector<128x128xbf16>
    %cst = arith.constant dense<0.000000e+00> : vector<8x128xf32>
    %2 = tpu.matmul %0, %1, %cst {dimension_numbers = #tpu.dot_dimension_numbers<[1], [0], [0], [1], [0, 0, 1, 1], [], []>} : vector<8x128xbf16>, vector<128x128xbf16>, vector<8x128xf32> -> vector<8x128xf32>
    %c0_3 = arith.constant 0 : index
    %c0_4 = arith.constant 0 : index
    %3 = vector.load %arg3[%c0_3, %c0_4] : memref<1x128xf32, #tpu.memory_space<vmem>>, vector<1x128xf32>
    %4 = vector.broadcast %3 : vector<1x128xf32> to vector<8x128xf32>
    %5 = arith.addf %2, %4 : vector<8x128xf32>
    %cst_5 = arith.constant 0.000000e+00 : f32
    %6 = vector.broadcast %cst_5 : f32 to vector<8x128xf32>
    %7 = arith.maximumf %5, %6 : vector<8x128xf32>
    %8 = arith.truncf %7 : vector<8x128xf32> to vector<8x128xbf16>
    %c0_6 = arith.constant 0 : index
    %c0_7 = arith.constant 0 : index
    %9 = vector.load %arg4[%c0_6, %c0_7] : memref<128x128xbf16, #tpu.memory_space<vmem>>, vector<128x128xbf16>
    %cst_8 = arith.constant dense<0.000000e+00> : vector<8x128xf32>
    %10 = tpu.matmul %8, %9, %cst_8 {dimension_numbers = #tpu.dot_dimension_numbers<[1], [0], [0], [1], [0, 0, 1, 1], [], []>} : vector<8x128xbf16>, vector<128x128xbf16>, vector<8x128xf32> -> vector<8x128xf32>
    %c0_9 = arith.constant 0 : index
    %c0_10 = arith.constant 0 : index
    %11 = vector.load %arg5[%c0_9, %c0_10] : memref<1x128xf32, #tpu.memory_space<vmem>>, vector<1x128xf32>
    %12 = vector.broadcast %11 : vector<1x128xf32> to vector<8x128xf32>
    %13 = arith.addf %10, %12 : vector<8x128xf32>
    %cst_11 = arith.constant 0.000000e+00 : f32
    %14 = vector.broadcast %cst_11 : f32 to vector<8x128xf32>
    %15 = arith.maximumf %13, %14 : vector<8x128xf32>
    %16 = arith.truncf %15 : vector<8x128xf32> to vector<8x128xbf16>
    %c0_12 = arith.constant 0 : index
    %c0_13 = arith.constant 0 : index
    %17 = vector.load %arg6[%c0_12, %c0_13] : memref<128x128xbf16, #tpu.memory_space<vmem>>, vector<128x128xbf16>
    %cst_14 = arith.constant dense<0.000000e+00> : vector<8x128xf32>
    %18 = tpu.matmul %16, %17, %cst_14 {dimension_numbers = #tpu.dot_dimension_numbers<[1], [0], [0], [1], [0, 0, 1, 1], [], []>} : vector<8x128xbf16>, vector<128x128xbf16>, vector<8x128xf32> -> vector<8x128xf32>
    %c0_15 = arith.constant 0 : index
    %c0_16 = arith.constant 0 : index
    %19 = vector.load %arg7[%c0_15, %c0_16] : memref<1x128xf32, #tpu.memory_space<vmem>>, vector<1x128xf32>
    %20 = vector.broadcast %19 : vector<1x128xf32> to vector<8x128xf32>
    %21 = arith.addf %18, %20 : vector<8x128xf32>
    %cst_17 = arith.constant 0.000000e+00 : f32
    %22 = vector.broadcast %cst_17 : f32 to vector<8x128xf32>
    %23 = arith.maximumf %21, %22 : vector<8x128xf32>
    %24 = arith.truncf %23 : vector<8x128xf32> to vector<8x128xbf16>
    %c0_18 = arith.constant 0 : index
    %c0_19 = arith.constant 0 : index
    %25 = vector.load %arg8[%c0_18, %c0_19] : memref<128x128xbf16, #tpu.memory_space<vmem>>, vector<128x128xbf16>
    %cst_20 = arith.constant dense<0.000000e+00> : vector<8x128xf32>
    %26 = tpu.matmul %24, %25, %cst_20 {dimension_numbers = #tpu.dot_dimension_numbers<[1], [0], [0], [1], [0, 0, 1, 1], [], []>} : vector<8x128xbf16>, vector<128x128xbf16>, vector<8x128xf32> -> vector<8x128xf32>
    %c0_21 = arith.constant 0 : index
    %c0_22 = arith.constant 0 : index
    %27 = vector.load %arg9[%c0_21, %c0_22] : memref<1x128xf32, #tpu.memory_space<vmem>>, vector<1x128xf32>
    %28 = vector.broadcast %27 : vector<1x128xf32> to vector<8x128xf32>
    %29 = arith.addf %26, %28 : vector<8x128xf32>
    %cst_23 = arith.constant 0.000000e+00 : f32
    %30 = vector.broadcast %cst_23 : f32 to vector<8x128xf32>
    %31 = arith.maximumf %29, %30 : vector<8x128xf32>
    %32 = arith.truncf %31 : vector<8x128xf32> to vector<8x128xbf16>
    %c0_24 = arith.constant 0 : index
    %c0_25 = arith.constant 0 : index
    %33 = vector.load %arg10[%c0_24, %c0_25] : memref<128x128xbf16, #tpu.memory_space<vmem>>, vector<128x128xbf16>
    %cst_26 = arith.constant dense<0.000000e+00> : vector<8x128xf32>
    %34 = tpu.matmul %32, %33, %cst_26 {dimension_numbers = #tpu.dot_dimension_numbers<[1], [0], [0], [1], [0, 0, 1, 1], [], []>} : vector<8x128xbf16>, vector<128x128xbf16>, vector<8x128xf32> -> vector<8x128xf32>
    %c0_27 = arith.constant 0 : index
    %c0_28 = arith.constant 0 : index
    %35 = vector.load %arg11[%c0_27, %c0_28] : memref<1x128xf32, #tpu.memory_space<vmem>>, vector<1x128xf32>
    %36 = vector.broadcast %35 : vector<1x128xf32> to vector<8x128xf32>
    %37 = arith.addf %34, %36 : vector<8x128xf32>
    %cst_29 = arith.constant 0.000000e+00 : f32
    %38 = vector.broadcast %cst_29 : f32 to vector<8x128xf32>
    %39 = arith.maximumf %37, %38 : vector<8x128xf32>
    %40 = arith.truncf %39 : vector<8x128xf32> to vector<8x128xbf16>
    %c0_30 = arith.constant 0 : index
    %c0_31 = arith.constant 0 : index
    %41 = vector.load %arg12[%c0_30, %c0_31] : memref<128x128xbf16, #tpu.memory_space<vmem>>, vector<128x128xbf16>
    %cst_32 = arith.constant dense<0.000000e+00> : vector<8x128xf32>
    %42 = tpu.matmul %40, %41, %cst_32 {dimension_numbers = #tpu.dot_dimension_numbers<[1], [0], [0], [1], [0, 0, 1, 1], [], []>} : vector<8x128xbf16>, vector<128x128xbf16>, vector<8x128xf32> -> vector<8x128xf32>
    %c0_33 = arith.constant 0 : index
    %c0_34 = arith.constant 0 : index
    %43 = vector.load %arg13[%c0_33, %c0_34] : memref<1x128xf32, #tpu.memory_space<vmem>>, vector<1x128xf32>
    %44 = vector.broadcast %43 : vector<1x128xf32> to vector<8x128xf32>
    %45 = arith.addf %42, %44 : vector<8x128xf32>
    %c0_35 = arith.constant 0 : index
    %c0_36 = arith.constant 0 : index
    %46 = vector.load %arg14[%c0_35, %c0_36] : memref<8x128xf32, #tpu.memory_space<vmem>>, vector<8x128xf32>
    tpu.vector_store %arg14[%c0_35, %c0_36], %45 {strides = array<i32>} : memref<8x128xf32, #tpu.memory_space<vmem>>, vector<8x128xf32>,
    return
  }
  func.func @transform_0(%arg0: i32) -> (i32, i32) {
    %c0_i32 = arith.constant 0 : i32
    %c0_i32_0 = arith.constant 0 : i32
    return %arg0, %c0_i32 : i32, i32
  }
  func.func @transform_1(%arg0: i32) -> (i32, i32) {
    %c0_i32 = arith.constant 0 : i32
    %c0_i32_0 = arith.constant 0 : i32
    %c0_i32_1 = arith.constant 0 : i32
    return %c0_i32, %c0_i32_0 : i32, i32
  }
  func.func @transform_2(%arg0: i32) -> (i32, i32) {
    %c0_i32 = arith.constant 0 : i32
    %c0_i32_0 = arith.constant 0 : i32
    %c0_i32_1 = arith.constant 0 : i32
    return %c0_i32, %c0_i32_0 : i32, i32
  }
  func.func @transform_3(%arg0: i32) -> (i32, i32) {
    %c0_i32 = arith.constant 0 : i32
    %c0_i32_0 = arith.constant 0 : i32
    %c0_i32_1 = arith.constant 0 : i32
    return %c0_i32, %c0_i32_0 : i32, i32
  }
  func.func @transform_4(%arg0: i32) -> (i32, i32) {
    %c0_i32 = arith.constant 0 : i32
    %c0_i32_0 = arith.constant 0 : i32
    %c0_i32_1 = arith.constant 0 : i32
    return %c0_i32, %c0_i32_0 : i32, i32
  }
  func.func @transform_5(%arg0: i32) -> (i32, i32) {
    %c0_i32 = arith.constant 0 : i32
    %c0_i32_0 = arith.constant 0 : i32
    %c0_i32_1 = arith.constant 0 : i32
    return %c0_i32, %c0_i32_0 : i32, i32
  }
  func.func @transform_6(%arg0: i32) -> (i32, i32) {
    %c0_i32 = arith.constant 0 : i32
    %c0_i32_0 = arith.constant 0 : i32
    %c0_i32_1 = arith.constant 0 : i32
    return %c0_i32, %c0_i32_0 : i32, i32
  }
  func.func @transform_7(%arg0: i32) -> (i32, i32) {
    %c0_i32 = arith.constant 0 : i32
    %c0_i32_0 = arith.constant 0 : i32
    %c0_i32_1 = arith.constant 0 : i32
    return %c0_i32, %c0_i32_0 : i32, i32
  }
  func.func @transform_8(%arg0: i32) -> (i32, i32) {
    %c0_i32 = arith.constant 0 : i32
    %c0_i32_0 = arith.constant 0 : i32
    %c0_i32_1 = arith.constant 0 : i32
    return %c0_i32, %c0_i32_0 : i32, i32
  }
  func.func @transform_9(%arg0: i32) -> (i32, i32) {
    %c0_i32 = arith.constant 0 : i32
    %c0_i32_0 = arith.constant 0 : i32
    %c0_i32_1 = arith.constant 0 : i32
    return %c0_i32, %c0_i32_0 : i32, i32
  }
  func.func @transform_10(%arg0: i32) -> (i32, i32) {
    %c0_i32 = arith.constant 0 : i32
    %c0_i32_0 = arith.constant 0 : i32
    %c0_i32_1 = arith.constant 0 : i32
    return %c0_i32, %c0_i32_0 : i32, i32
  }
  func.func @transform_11(%arg0: i32) -> (i32, i32) {
    %c0_i32 = arith.constant 0 : i32
    %c0_i32_0 = arith.constant 0 : i32
    %c0_i32_1 = arith.constant 0 : i32
    return %c0_i32, %c0_i32_0 : i32, i32
  }
  func.func @transform_12(%arg0: i32) -> (i32, i32) {
    %c0_i32 = arith.constant 0 : i32
    %c0_i32_0 = arith.constant 0 : i32
    %c0_i32_1 = arith.constant 0 : i32
    return %c0_i32, %c0_i32_0 : i32, i32
  }
  func.func @transform_13(%arg0: i32) -> (i32, i32) {
    %c0_i32 = arith.constant 0 : i32
    %c0_i32_0 = arith.constant 0 : i32
    return %arg0, %c0_i32 : i32, i32
  }
}

</mosaic_0001>

<llo_original>
// kernel: tpu_custom_call.1
$region0: #{tpu_custom_call.1}
  #allocation0 [shape = 'u32[]', space=smem, size = 0x4, offset = 0x4, fixed_abs, tag = 'smem constant byte address 0x4 - core index']
  #allocation1 [shape = 'u32[144,128]{1,0:T(1,128)}', space=vmem, size = 0x12000, scoped, tag = 'internal scratch']
  %s0 = inlined_call_operand.hbm [shape: bf16[8,128], index: 0, kind: input, shape index: {}]
  %s1 = inlined_call_operand.hbm [shape: bf16[128,128], index: 1, kind: input, shape index: {}]
  %s2 = inlined_call_operand.vmem [shape: f32[1,128], index: 2, kind: input, shape index: {}]
  %s3 = inlined_call_operand.hbm [shape: bf16[128,128], index: 3, kind: input, shape index: {}]
  %s4 = inlined_call_operand.vmem [shape: f32[1,128], index: 4, kind: input, shape index: {}]
  %s5 = inlined_call_operand.hbm [shape: bf16[128,128], index: 5, kind: input, shape index: {}]
  %s6 = inlined_call_operand.vmem [shape: f32[1,128], index: 6, kind: input, shape index: {}]
  %s7 = inlined_call_operand.hbm [shape: bf16[128,128], index: 7, kind: input, shape index: {}]
  %s8 = inlined_call_operand.vmem [shape: f32[1,128], index: 8, kind: input, shape index: {}]
  %s9 = inlined_call_operand.hbm [shape: bf16[128,128], index: 9, kind: input, shape index: {}]
  %s10 = inlined_call_operand.vmem [shape: f32[1,128], index: 10, kind: input, shape index: {}]
  %s11 = inlined_call_operand.hbm [shape: bf16[128,128], index: 11, kind: input, shape index: {}]
  %s12 = inlined_call_operand.vmem [shape: f32[1,128], index: 12, kind: input, shape index: {}]
  %s13 = inlined_call_operand.hbm [shape: f32[8,128], index: 13, kind: output, shape index: {}]
  %s14 = sld [smem:[#allocation0]]
  $region90: #{tpu_custom_call.1} parent=0
    _
  %s16 = ssub.s32 1, %s14
  %s17 = scalar_select 0, %s16, %s14
  $region1: #{tpu_custom_call.1} parent=0
    #allocation2 [shape = 'u8[2048]{0}', space=vmem, size = 0x800, scoped, tag = 'input window, operand 0, single buffered']
    #allocation3 [shape = 's32[1]{0}', space=sflag, size = 0x4, scoped, tag = 'scoped memory for tpu_custom_call.1']
    #allocation4 [shape = 's32[1]{0}', space=sflag, size = 0x4, scoped, tag = 'scoped memory for tpu_custom_call.1']
    #allocation5 [shape = 'u8[32768]{0}', space=vmem, size = 0x8000, scoped, tag = 'input window, operand 1, single buffered']
    #allocation6 [shape = 's32[1]{0}', space=sflag, size = 0x4, scoped, tag = 'scoped memory for tpu_custom_call.1']
    #allocation7 [shape = 'u8[32768]{0}', space=vmem, size = 0x8000, scoped, tag = 'input window, operand 3, single buffered']
    #allocation8 [shape = 'u8[32768]{0}', space=vmem, size = 0x8000, scoped, tag = 'input window, operand 5, single buffered']
    #allocation9 [shape = 's32[1]{0}', space=sflag, size = 0x4, scoped, tag = 'scoped memory for tpu_custom_call.1']
    #allocation10 [shape = 'u8[32768]{0}', space=vmem, size = 0x8000, scoped, tag = 'input window, operand 7, single buffered']
    #allocation11 [shape = 'u8[32768]{0}', space=vmem, size = 0x8000, scoped, tag = 'input window, operand 9, single buffered']
    #allocation12 [shape = 's32[1]{0}', space=sflag, size = 0x4, scoped, tag = 'scoped memory for tpu_custom_call.1']
    #allocation13 [shape = 'u8[32768]{0}', space=vmem, size = 0x8000, scoped, tag = 'input window, operand 11, single buffered']
    #allocation14 [shape = 'u8[4096]{0}', space=vmem, size = 0x1000, scoped, tag = 'output window, operand 0, single buffered']
    %18 = vsyncpa [#allocation3], 0
    %19 = vsyncpa [#allocation6], 0
    %20 = vsyncpa [#allocation9], 0
    %21 = vsyncpa [#allocation12], 0
    %22 = vsyncpa [#allocation4], 0
    // Predicated region
    $region2: #{tpu_custom_call.1} parent=1 // pred_check
      _
    $region3: #{tpu_custom_call.1} parent=1 // pred_check_branch
      %24 = sbr.rel (0) target = $region5
    $region4: #{tpu_custom_call.1} parent=1 // pred_region
      %s26 = ssub.s32 64, 64
      %27 = vsyncadd [#allocation3], %s26
      %s29 = sshll.u32 [#allocation2], 4
      %s30 = int_to_ptr.vmem [resolvable:$true] %s29
      %32 = dma.hbm_to_vmem [thread:$0]  %s0, 64, %s30, [#allocation3]
    $region5: #{tpu_custom_call.1} parent=1 // pred_fallthru
      _
    // Predicated region
    $region6: #{tpu_custom_call.1} parent=1 // pred_check
      _
    $region7: #{tpu_custom_call.1} parent=1 // pred_check_branch
      %34 = sbr.rel (0) target = $region9
    $region8: #{tpu_custom_call.1} parent=1 // pred_region
      %s36 = ssub.s32 1024, 1024
      %37 = vsyncadd [#allocation6], %s36
      %s38 = sshll.u32 [#allocation5], 4
      %s39 = int_to_ptr.vmem [resolvable:$true] %s38
      %44 = dma.hbm_to_vmem [thread:$0]  %s1, 1024, %s39, [#allocation6], 64, 64, 4
    $region9: #{tpu_custom_call.1} parent=1 // pred_fallthru
      _
    // Predicated region
    $region10: #{tpu_custom_call.1} parent=1 // pred_check
      _
    $region11: #{tpu_custom_call.1} parent=1 // pred_check_branch
      %46 = sbr.rel (0) target = $region13
    $region12: #{tpu_custom_call.1} parent=1 // pred_region
      _
    $region13: #{tpu_custom_call.1} parent=1 // pred_fallthru
      _
    // Predicated region
    $region14: #{tpu_custom_call.1} parent=1 // pred_check
      _
    $region15: #{tpu_custom_call.1} parent=1 // pred_check_branch
      %48 = sbr.rel (0) target = $region17
    $region16: #{tpu_custom_call.1} parent=1 // pred_region
      %s50 = ssub.s32 1024, 1024
      %51 = vsyncadd [#allocation6], %s50
      %s52 = sshll.u32 [#allocation7], 4
      %s53 = int_to_ptr.vmem [resolvable:$true] %s52
      %58 = dma.hbm_to_vmem [thread:$0]  %s3, 1024, %s53, [#allocation6], 64, 64, 4
    $region17: #{tpu_custom_call.1} parent=1 // pred_fallthru
      _
    // Predicated region
    $region18: #{tpu_custom_call.1} parent=1 // pred_check
      _
    $region19: #{tpu_custom_call.1} parent=1 // pred_check_branch
      %60 = sbr.rel (0) target = $region21
    $region20: #{tpu_custom_call.1} parent=1 // pred_region
      _
    $region21: #{tpu_custom_call.1} parent=1 // pred_fallthru
      _
    // Predicated region
    $region22: #{tpu_custom_call.1} parent=1 // pred_check
      _
    $region23: #{tpu_custom_call.1} parent=1 // pred_check_branch
      %62 = sbr.rel (0) target = $region25
    $region24: #{tpu_custom_call.1} parent=1 // pred_region
      %s64 = ssub.s32 1024, 1024
      %65 = vsyncadd [#allocation9], %s64
      %s66 = sshll.u32 [#allocation8], 4
      %s67 = int_to_ptr.vmem [resolvable:$true] %s66
      %72 = dma.hbm_to_vmem [thread:$0]  %s5, 1024, %s67, [#allocation9], 64, 64, 4
    $region25: #{tpu_custom_call.1} parent=1 // pred_fallthru
      _
    // Predicated region
    $region26: #{tpu_custom_call.1} parent=1 // pred_check
      _
    $region27: #{tpu_custom_call.1} parent=1 // pred_check_branch
      %74 = sbr.rel (0) target = $region29
    $region28: #{tpu_custom_call.1} parent=1 // pred_region
      _
    $region29: #{tpu_custom_call.1} parent=1 // pred_fallthru
      _
    // Predicated region
    $region30: #{tpu_custom_call.1} parent=1 // pred_check
      _
    $region31: #{tpu_custom_call.1} parent=1 // pred_check_branch
      %76 = sbr.rel (0) target = $region33
    $region32: #{tpu_custom_call.1} parent=1 // pred_region
      %s78 = ssub.s32 1024, 1024
      %79 = vsyncadd [#allocation9], %s78
      %s80 = sshll.u32 [#allocation10], 4
      %s81 = int_to_ptr.vmem [resolvable:$true] %s80
      %86 = dma.hbm_to_vmem [thread:$0]  %s7, 1024, %s81, [#allocation9], 64, 64, 4
    $region33: #{tpu_custom_call.1} parent=1 // pred_fallthru
      _
    // Predicated region
    $region34: #{tpu_custom_call.1} parent=1 // pred_check
      _
    $region35: #{tpu_custom_call.1} parent=1 // pred_check_branch
      %88 = sbr.rel (0) target = $region37
    $region36: #{tpu_custom_call.1} parent=1 // pred_region
      _
    $region37: #{tpu_custom_call.1} parent=1 // pred_fallthru
      _
    // Predicated region
    $region38: #{tpu_custom_call.1} parent=1 // pred_check
      _
    $region39: #{tpu_custom_call.1} parent=1 // pred_check_branch
      %90 = sbr.rel (0) target = $region41
    $region40: #{tpu_custom_call.1} parent=1 // pred_region
      %s92 = ssub.s32 1024, 1024
      %93 = vsyncadd [#allocation12], %s92
      %s94 = sshll.u32 [#allocation11], 4
      %s95 = int_to_ptr.vmem [resolvable:$true] %s94
      %100 = dma.hbm_to_vmem [thread:$0]  %s9, 1024, %s95, [#allocation12], 64, 64, 4
    $region41: #{tpu_custom_call.1} parent=1 // pred_fallthru
      _
    // Predicated region
    $region42: #{tpu_custom_call.1} parent=1 // pred_check
      _
    $region43: #{tpu_custom_call.1} parent=1 // pred_check_branch
      %102 = sbr.rel (0) target = $region45
    $region44: #{tpu_custom_call.1} parent=1 // pred_region
      _
    $region45: #{tpu_custom_call.1} parent=1 // pred_fallthru
      _
    // Predicated region
    $region46: #{tpu_custom_call.1} parent=1 // pred_check
      _
    $region47: #{tpu_custom_call.1} parent=1 // pred_check_branch
      %104 = sbr.rel (0) target = $region49
    $region48: #{tpu_custom_call.1} parent=1 // pred_region
      %s106 = ssub.s32 1024, 1024
      %107 = vsyncadd [#allocation12], %s106
      %s108 = sshll.u32 [#allocation13], 4
      %s109 = int_to_ptr.vmem [resolvable:$true] %s108
      %114 = dma.hbm_to_vmem [thread:$0]  %s11, 1024, %s109, [#allocation12], 64, 64, 4
    $region49: #{tpu_custom_call.1} parent=1 // pred_fallthru
      _
    // Predicated region
    $region50: #{tpu_custom_call.1} parent=1 // pred_check
      _
    $region51: #{tpu_custom_call.1} parent=1 // pred_check_branch
      %116 = sbr.rel (0) target = $region53
    $region52: #{tpu_custom_call.1} parent=1 // pred_region
      _
    $region53: #{tpu_custom_call.1} parent=1 // pred_fallthru
      _
    // Predicated region
    $region54: #{tpu_custom_call.1} parent=1 // pred_check
      _
    $region55: #{tpu_custom_call.1} parent=1 // pred_check_branch
      %118 = sbr.rel (0) target = $region57
    $region56: #{tpu_custom_call.1} parent=1 // pred_region
      %119 = dma.done [#allocation3], 64
    $region57: #{tpu_custom_call.1} parent=1 // pred_fallthru
      _
    // Predicated region
    $region58: #{tpu_custom_call.1} parent=1 // pred_check
      _
    $region59: #{tpu_custom_call.1} parent=1 // pred_check_branch
      %121 = sbr.rel (0) target = $region61
    $region60: #{tpu_custom_call.1} parent=1 // pred_region
      %122 = dma.done [#allocation6], 1024
    $region61: #{tpu_custom_call.1} parent=1 // pred_fallthru
      _
    // Predicated region
    $region62: #{tpu_custom_call.1} parent=1 // pred_check
      _
    $region63: #{tpu_custom_call.1} parent=1 // pred_check_branch
      %124 = sbr.rel (0) target = $region65
    $region64: #{tpu_custom_call.1} parent=1 // pred_region
      %125 = dma.done [#allocation6], 1024
    $region65: #{tpu_custom_call.1} parent=1 // pred_fallthru
      _
    // Predicated region
    $region66: #{tpu_custom_call.1} parent=1 // pred_check
      _
    $region67: #{tpu_custom_call.1} parent=1 // pred_check_branch
      %127 = sbr.rel (0) target = $region69
    $region68: #{tpu_custom_call.1} parent=1 // pred_region
      %128 = dma.done [#allocation9], 1024
    $region69: #{tpu_custom_call.1} parent=1 // pred_fallthru
      _
    // Predicated region
    $region70: #{tpu_custom_call.1} parent=1 // pred_check
      _
    $region71: #{tpu_custom_call.1} parent=1 // pred_check_branch
      %130 = sbr.rel (0) target = $region73
    $region72: #{tpu_custom_call.1} parent=1 // pred_region
      %131 = dma.done [#allocation9], 1024
    $region73: #{tpu_custom_call.1} parent=1 // pred_fallthru
      _
    // Predicated region
    $region74: #{tpu_custom_call.1} parent=1 // pred_check
      _
    $region75: #{tpu_custom_call.1} parent=1 // pred_check_branch
      %133 = sbr.rel (0) target = $region77
    $region76: #{tpu_custom_call.1} parent=1 // pred_region
      %134 = dma.done [#allocation12], 1024
    $region77: #{tpu_custom_call.1} parent=1 // pred_fallthru
      _
    // Predicated region
    $region78: #{tpu_custom_call.1} parent=1 // pred_check
      _
    $region79: #{tpu_custom_call.1} parent=1 // pred_check_branch
      %136 = sbr.rel (0) target = $region81
    $region80: #{tpu_custom_call.1} parent=1 // pred_region
      %137 = dma.done [#allocation12], 1024
    $region81: #{tpu_custom_call.1} parent=1 // pred_fallthru
      _
    %v139 = vld [vmem:[#allocation2] sm:$0xf]
    %v140 = vld [vmem:[#allocation5] sm:$0xf]
    %v141 = vld [vmem:[#allocation5 + $0x4] sm:$0xf]
    %v142 = vld [vmem:[#allocation5 + $0x8] sm:$0xf]
    %v143 = vld [vmem:[#allocation5 + $0xc] sm:$0xf]
    %v144 = vld [vmem:[#allocation5 + $0x10] sm:$0xf]
    %v145 = vld [vmem:[#allocation5 + $0x14] sm:$0xf]
    %v146 = vld [vmem:[#allocation5 + $0x18] sm:$0xf]
    %v147 = vld [vmem:[#allocation5 + $0x1c] sm:$0xf]
    %v148 = vld [vmem:[#allocation5 + $0x20] sm:$0xf]
    %v149 = vld [vmem:[#allocation5 + $0x24] sm:$0xf]
    %v150 = vld [vmem:[#allocation5 + $0x28] sm:$0xf]
    %v151 = vld [vmem:[#allocation5 + $0x2c] sm:$0xf]
    %v152 = vld [vmem:[#allocation5 + $0x30] sm:$0xf]
    %v153 = vld [vmem:[#allocation5 + $0x34] sm:$0xf]
    %v154 = vld [vmem:[#allocation5 + $0x38] sm:$0xf]
    %v155 = vld [vmem:[#allocation5 + $0x3c] sm:$0xf]
    %v156 = vld [vmem:[%s2] sm:$0x1]
    %v158 = vlaneseq
    %v159 = vshrl.u32 %v158, 7
    %v160 = vsub.s32 0, %v159
    %v161 = vrot.slane %v156, %v160
    %v179 = vunpack.c.l.b16 %v140
    %v180 = vunpack.c.l.b16 %v141
    %v181 = vunpack.c.l.b16 %v142
    %v182 = vunpack.c.l.b16 %v143
    %v183 = vunpack.c.l.b16 %v144
    %v184 = vunpack.c.l.b16 %v145
    %v185 = vunpack.c.l.b16 %v146
    %v186 = vunpack.c.l.b16 %v147
    %v187 = vunpack.c.l.b16 %v148
    %v188 = vunpack.c.l.b16 %v149
    %v189 = vunpack.c.l.b16 %v150
    %v190 = vunpack.c.l.b16 %v151
    %v191 = vunpack.c.l.b16 %v152
    %v192 = vunpack.c.l.b16 %v153
    %v193 = vunpack.c.l.b16 %v154
    %v194 = vunpack.c.l.b16 %v155
    %v195 = vpack.c.b16 %v180, %v179
    %v196 = vpack.c.b16 %v182, %v181
    %v197 = vpack.c.b16 %v184, %v183
    %v198 = vpack.c.b16 %v186, %v185
    %v199 = vpack.c.b16 %v188, %v187
    %v200 = vpack.c.b16 %v190, %v189
    %v201 = vpack.c.b16 %v192, %v191
    %v202 = vpack.c.b16 %v194, %v193
    %211 = vmatprep.subr.bf16.mxu0 0
    %212 = vmatpush1.bf16.msra.mxu0 %v195
    %213 = vmatprep.subr.bf16.mxu0 0
    %214 = vmatpush1.bf16.msra.mxu0 %v196
    %215 = vmatprep.subr.bf16.mxu0 0
    %216 = vmatpush1.bf16.msra.mxu0 %v197
    %217 = vmatprep.subr.bf16.mxu0 0
    %218 = vmatpush1.bf16.msra.mxu0 %v198
    %219 = vmatprep.subr.bf16.mxu0 0
    %220 = vmatpush1.bf16.msra.mxu0 %v199
    %221 = vmatprep.subr.bf16.mxu0 0
    %222 = vmatpush1.bf16.msra.mxu0 %v200
    %223 = vmatprep.subr.bf16.mxu0 0
    %224 = vmatpush1.bf16.msra.mxu0 %v201
    %225 = vmatprep.subr.bf16.mxu0 0
    %226 = vmatpush1.bf16.msra.mxu0 %v202
    %227 = vmatprep.subr.bf16.mxu0 0
    %228 = vmatpush1.bf16.msra.mxu0 0
    %229 = vmatprep.subr.bf16.mxu0 0
    %230 = vmatpush1.bf16.msra.mxu0 0
    %231 = vmatprep.subr.bf16.mxu0 0
    %232 = vmatpush1.bf16.msra.mxu0 0
    %233 = vmatprep.subr.bf16.mxu0 0
    %234 = vmatpush1.bf16.msra.mxu0 0
    %235 = vmatprep.subr.bf16.mxu0 0
    %236 = vmatpush1.bf16.msra.mxu0 0
    %237 = vmatprep.subr.bf16.mxu0 0
    %238 = vmatpush1.bf16.msra.mxu0 0
    %239 = vmatprep.subr.bf16.mxu0 0
    %240 = vmatpush1.bf16.msra.mxu0 0
    %241 = vmatprep.subr.bf16.mxu0 0
    %242 = vmatpush1.bf16.msra.mxu0 0
    %243 = vmatprep.mubr.bf16.mxu0 0
    %244 = vmatmul.mubr.bf16.gmra.mrb[0].mxu0 %v139
    %v245 = vpop.f32.mrb[0].mxu0
    %v246 = vadd.f32 %v161, %v245
    %v247 = vpop.f32.mrb[0].mxu0
    %v248 = vpop.f32.mrb[0].mxu0
    %v249 = vpop.f32.mrb[0].mxu0
    %250 = vdwg.mxu0
    %v251 = vmax.f32 %v246, 0.0
    %v252 = vpack.c.bf16 %v251, %v251
    %v253 = vld [vmem:[#allocation7] sm:$0xf]
    %v254 = vld [vmem:[#allocation7 + $0x4] sm:$0xf]
    %v255 = vld [vmem:[#allocation7 + $0x8] sm:$0xf]
    %v256 = vld [vmem:[#allocation7 + $0xc] sm:$0xf]
    %v257 = vld [vmem:[#allocation7 + $0x10] sm:$0xf]
    %v258 = vld [vmem:[#allocation7 + $0x14] sm:$0xf]
    %v259 = vld [vmem:[#allocation7 + $0x18] sm:$0xf]
    %v260 = vld [vmem:[#allocation7 + $0x1c] sm:$0xf]
    %v261 = vld [vmem:[#allocation7 + $0x20] sm:$0xf]
    %v262 = vld [vmem:[#allocation7 + $0x24] sm:$0xf]
    %v263 = vld [vmem:[#allocation7 + $0x28] sm:$0xf]
    %v264 = vld [vmem:[#allocation7 + $0x2c] sm:$0xf]
    %v265 = vld [vmem:[#allocation7 + $0x30] sm:$0xf]
    %v266 = vld [vmem:[#allocation7 + $0x34] sm:$0xf]
    %v267 = vld [vmem:[#allocation7 + $0x38] sm:$0xf]
    %v268 = vld [vmem:[#allocation7 + $0x3c] sm:$0xf]
    %v269 = vld [vmem:[%s4] sm:$0x1]
    %v271 = vlaneseq
    %v272 = vshrl.u32 %v271, 7
    %v273 = vsub.s32 0, %v272
    %v274 = vrot.slane %v269, %v273
    %v292 = vunpack.c.l.b16 %v253
    %v293 = vunpack.c.l.b16 %v254
    %v294 = vunpack.c.l.b16 %v255
    %v295 = vunpack.c.l.b16 %v256
    %v296 = vunpack.c.l.b16 %v257
    %v297 = vunpack.c.l.b16 %v258
    %v298 = vunpack.c.l.b16 %v259
    %v299 = vunpack.c.l.b16 %v260
    %v300 = vunpack.c.l.b16 %v261
    %v301 = vunpack.c.l.b16 %v262
    %v302 = vunpack.c.l.b16 %v263
    %v303 = vunpack.c.l.b16 %v264
    %v304 = vunpack.c.l.b16 %v265
    %v305 = vunpack.c.l.b16 %v266
    %v306 = vunpack.c.l.b16 %v267
    %v307 = vunpack.c.l.b16 %v268
    %v308 = vpack.c.b16 %v293, %v292
    %v309 = vpack.c.b16 %v295, %v294
    %v310 = vpack.c.b16 %v297, %v296
    %v311 = vpack.c.b16 %v299, %v298
    %v312 = vpack.c.b16 %v301, %v300
    %v313 = vpack.c.b16 %v303, %v302
    %v314 = vpack.c.b16 %v305, %v304
    %v315 = vpack.c.b16 %v307, %v306
    %324 = vmatprep.subr.bf16.mxu0 0
    %325 = vmatpush1.bf16.msra.mxu0 %v308
    %326 = vmatprep.subr.bf16.mxu0 0
    %327 = vmatpush1.bf16.msra.mxu0 %v309
    %328 = vmatprep.subr.bf16.mxu0 0
    %329 = vmatpush1.bf16.msra.mxu0 %v310
    %330 = vmatprep.subr.bf16.mxu0 0
    %331 = vmatpush1.bf16.msra.mxu0 %v311
    %332 = vmatprep.subr.bf16.mxu0 0
    %333 = vmatpush1.bf16.msra.mxu0 %v312
    %334 = vmatprep.subr.bf16.mxu0 0
    %335 = vmatpush1.bf16.msra.mxu0 %v313
    %336 = vmatprep.subr.bf16.mxu0 0
    %337 = vmatpush1.bf16.msra.mxu0 %v314
    %338 = vmatprep.subr.bf16.mxu0 0
    %339 = vmatpush1.bf16.msra.mxu0 %v315
    %340 = vmatprep.subr.bf16.mxu0 0
    %341 = vmatpush1.bf16.msra.mxu0 0
    %342 = vmatprep.subr.bf16.mxu0 0
    %343 = vmatpush1.bf16.msra.mxu0 0
    %344 = vmatprep.subr.bf16.mxu0 0
    %345 = vmatpush1.bf16.msra.mxu0 0
    %346 = vmatprep.subr.bf16.mxu0 0
    %347 = vmatpush1.bf16.msra.mxu0 0
    %348 = vmatprep.subr.bf16.mxu0 0
    %349 = vmatpush1.bf16.msra.mxu0 0
    %350 = vmatprep.subr.bf16.mxu0 0
    %351 = vmatpush1.bf16.msra.mxu0 0
    %352 = vmatprep.subr.bf16.mxu0 0
    %353 = vmatpush1.bf16.msra.mxu0 0
    %354 = vmatprep.subr.bf16.mxu0 0
    %355 = vmatpush1.bf16.msra.mxu0 0
    %356 = vmatprep.mubr.bf16.mxu0 0
    %357 = vmatmul.mubr.bf16.gmra.mrb[0].mxu0 %v252
    %v358 = vpop.f32.mrb[0].mxu0
    %v359 = vadd.f32 %v274, %v358
    %v360 = vpop.f32.mrb[0].mxu0
    %v361 = vpop.f32.mrb[0].mxu0
    %v362 = vpop.f32.mrb[0].mxu0
    %363 = vdwg.mxu0
    %v364 = vmax.f32 %v359, 0.0
    %v365 = vpack.c.bf16 %v364, %v364
    %v366 = vld [vmem:[#allocation8] sm:$0xf]
    %v367 = vld [vmem:[#allocation8 + $0x4] sm:$0xf]
    %v368 = vld [vmem:[#allocation8 + $0x8] sm:$0xf]
    %v369 = vld [vmem:[#allocation8 + $0xc] sm:$0xf]
    %v370 = vld [vmem:[#allocation8 + $0x10] sm:$0xf]
    %v371 = vld [vmem:[#allocation8 + $0x14] sm:$0xf]
    %v372 = vld [vmem:[#allocation8 + $0x18] sm:$0xf]
    %v373 = vld [vmem:[#allocation8 + $0x1c] sm:$0xf]
    %v374 = vld [vmem:[#allocation8 + $0x20] sm:$0xf]
    %v375 = vld [vmem:[#allocation8 + $0x24] sm:$0xf]
    %v376 = vld [vmem:[#allocation8 + $0x28] sm:$0xf]
    %v377 = vld [vmem:[#allocation8 + $0x2c] sm:$0xf]
    %v378 = vld [vmem:[#allocation8 + $0x30] sm:$0xf]
    %v379 = vld [vmem:[#allocation8 + $0x34] sm:$0xf]
    %v380 = vld [vmem:[#allocation8 + $0x38] sm:$0xf]
    %v381 = vld [vmem:[#allocation8 + $0x3c] sm:$0xf]
    %v382 = vld [vmem:[%s6] sm:$0x1]
    %v384 = vlaneseq
    %v385 = vshrl.u32 %v384, 7
    %v386 = vsub.s32 0, %v385
    %v387 = vrot.slane %v382, %v386
    %v405 = vunpack.c.l.b16 %v366
    %v406 = vunpack.c.l.b16 %v367
    %v407 = vunpack.c.l.b16 %v368
    %v408 = vunpack.c.l.b16 %v369
    %v409 = vunpack.c.l.b16 %v370
    %v410 = vunpack.c.l.b16 %v371
    %v411 = vunpack.c.l.b16 %v372
    %v412 = vunpack.c.l.b16 %v373
    %v413 = vunpack.c.l.b16 %v374
    %v414 = vunpack.c.l.b16 %v375
    %v415 = vunpack.c.l.b16 %v376
    %v416 = vunpack.c.l.b16 %v377
    %v417 = vunpack.c.l.b16 %v378
    %v418 = vunpack.c.l.b16 %v379
    %v419 = vunpack.c.l.b16 %v380
    %v420 = vunpack.c.l.b16 %v381
    %v421 = vpack.c.b16 %v406, %v405
    %v422 = vpack.c.b16 %v408, %v407
    %v423 = vpack.c.b16 %v410, %v409
    %v424 = vpack.c.b16 %v412, %v411
    %v425 = vpack.c.b16 %v414, %v413
    %v426 = vpack.c.b16 %v416, %v415
    %v427 = vpack.c.b16 %v418, %v417
    %v428 = vpack.c.b16 %v420, %v419
    %437 = vmatprep.subr.bf16.mxu0 0
    %438 = vmatpush1.bf16.msra.mxu0 %v421
    %439 = vmatprep.subr.bf16.mxu0 0
    %440 = vmatpush1.bf16.msra.mxu0 %v422
    %441 = vmatprep.subr.bf16.mxu0 0
    %442 = vmatpush1.bf16.msra.mxu0 %v423
    %443 = vmatprep.subr.bf16.mxu0 0
    %444 = vmatpush1.bf16.msra.mxu0 %v424
    %445 = vmatprep.subr.bf16.mxu0 0
    %446 = vmatpush1.bf16.msra.mxu0 %v425
    %447 = vmatprep.subr.bf16.mxu0 0
    %448 = vmatpush1.bf16.msra.mxu0 %v426
    %449 = vmatprep.subr.bf16.mxu0 0
    %450 = vmatpush1.bf16.msra.mxu0 %v427
    %451 = vmatprep.subr.bf16.mxu0 0
    %452 = vmatpush1.bf16.msra.mxu0 %v428
    %453 = vmatprep.subr.bf16.mxu0 0
    %454 = vmatpush1.bf16.msra.mxu0 0
    %455 = vmatprep.subr.bf16.mxu0 0
    %456 = vmatpush1.bf16.msra.mxu0 0
    %457 = vmatprep.subr.bf16.mxu0 0
    %458 = vmatpush1.bf16.msra.mxu0 0
    %459 = vmatprep.subr.bf16.mxu0 0
    %460 = vmatpush1.bf16.msra.mxu0 0
    %461 = vmatprep.subr.bf16.mxu0 0
    %462 = vmatpush1.bf16.msra.mxu0 0
    %463 = vmatprep.subr.bf16.mxu0 0
    %464 = vmatpush1.bf16.msra.mxu0 0
    %465 = vmatprep.subr.bf16.mxu0 0
    %466 = vmatpush1.bf16.msra.mxu0 0
    %467 = vmatprep.subr.bf16.mxu0 0
    %468 = vmatpush1.bf16.msra.mxu0 0
    %469 = vmatprep.mubr.bf16.mxu0 0
    %470 = vmatmul.mubr.bf16.gmra.mrb[0].mxu0 %v365
    %v471 = vpop.f32.mrb[0].mxu0
    %v472 = vadd.f32 %v387, %v471
    %v473 = vpop.f32.mrb[0].mxu0
    %v474 = vpop.f32.mrb[0].mxu0
    %v475 = vpop.f32.mrb[0].mxu0
    %476 = vdwg.mxu0
    %v477 = vmax.f32 %v472, 0.0
    %v478 = vpack.c.bf16 %v477, %v477
    %v479 = vld [vmem:[#allocation10] sm:$0xf]
    %v480 = vld [vmem:[#allocation10 + $0x4] sm:$0xf]
    %v481 = vld [vmem:[#allocation10 + $0x8] sm:$0xf]
    %v482 = vld [vmem:[#allocation10 + $0xc] sm:$0xf]
    %v483 = vld [vmem:[#allocation10 + $0x10] sm:$0xf]
    %v484 = vld [vmem:[#allocation10 + $0x14] sm:$0xf]
    %v485 = vld [vmem:[#allocation10 + $0x18] sm:$0xf]
    %v486 = vld [vmem:[#allocation10 + $0x1c] sm:$0xf]
    %v487 = vld [vmem:[#allocation10 + $0x20] sm:$0xf]
    %v488 = vld [vmem:[#allocation10 + $0x24] sm:$0xf]
    %v489 = vld [vmem:[#allocation10 + $0x28] sm:$0xf]
    %v490 = vld [vmem:[#allocation10 + $0x2c] sm:$0xf]
    %v491 = vld [vmem:[#allocation10 + $0x30] sm:$0xf]
    %v492 = vld [vmem:[#allocation10 + $0x34] sm:$0xf]
    %v493 = vld [vmem:[#allocation10 + $0x38] sm:$0xf]
    %v494 = vld [vmem:[#allocation10 + $0x3c] sm:$0xf]
    %v495 = vld [vmem:[%s8] sm:$0x1]
    %v497 = vlaneseq
    %v498 = vshrl.u32 %v497, 7
    %v499 = vsub.s32 0, %v498
    %v500 = vrot.slane %v495, %v499
    %v518 = vunpack.c.l.b16 %v479
    %v519 = vunpack.c.l.b16 %v480
    %v520 = vunpack.c.l.b16 %v481
    %v521 = vunpack.c.l.b16 %v482
    %v522 = vunpack.c.l.b16 %v483
    %v523 = vunpack.c.l.b16 %v484
    %v524 = vunpack.c.l.b16 %v485
    %v525 = vunpack.c.l.b16 %v486
    %v526 = vunpack.c.l.b16 %v487
    %v527 = vunpack.c.l.b16 %v488
    %v528 = vunpack.c.l.b16 %v489
    %v529 = vunpack.c.l.b16 %v490
    %v530 = vunpack.c.l.b16 %v491
    %v531 = vunpack.c.l.b16 %v492
    %v532 = vunpack.c.l.b16 %v493
    %v533 = vunpack.c.l.b16 %v494
    %v534 = vpack.c.b16 %v519, %v518
    %v535 = vpack.c.b16 %v521, %v520
    %v536 = vpack.c.b16 %v523, %v522
    %v537 = vpack.c.b16 %v525, %v524
    %v538 = vpack.c.b16 %v527, %v526
    %v539 = vpack.c.b16 %v529, %v528
    %v540 = vpack.c.b16 %v531, %v530
    %v541 = vpack.c.b16 %v533, %v532
    %550 = vmatprep.subr.bf16.mxu0 0
    %551 = vmatpush1.bf16.msra.mxu0 %v534
    %552 = vmatprep.subr.bf16.mxu0 0
    %553 = vmatpush1.bf16.msra.mxu0 %v535
    %554 = vmatprep.subr.bf16.mxu0 0
    %555 = vmatpush1.bf16.msra.mxu0 %v536
    %556 = vmatprep.subr.bf16.mxu0 0
    %557 = vmatpush1.bf16.msra.mxu0 %v537
    %558 = vmatprep.subr.bf16.mxu0 0
    %559 = vmatpush1.bf16.msra.mxu0 %v538
    %560 = vmatprep.subr.bf16.mxu0 0
    %561 = vmatpush1.bf16.msra.mxu0 %v539
    %562 = vmatprep.subr.bf16.mxu0 0
    %563 = vmatpush1.bf16.msra.mxu0 %v540
    %564 = vmatprep.subr.bf16.mxu0 0
    %565 = vmatpush1.bf16.msra.mxu0 %v541
    %566 = vmatprep.subr.bf16.mxu0 0
    %567 = vmatpush1.bf16.msra.mxu0 0
    %568 = vmatprep.subr.bf16.mxu0 0
    %569 = vmatpush1.bf16.msra.mxu0 0
    %570 = vmatprep.subr.bf16.mxu0 0
    %571 = vmatpush1.bf16.msra.mxu0 0
    %572 = vmatprep.subr.bf16.mxu0 0
    %573 = vmatpush1.bf16.msra.mxu0 0
    %574 = vmatprep.subr.bf16.mxu0 0
    %575 = vmatpush1.bf16.msra.mxu0 0
    %576 = vmatprep.subr.bf16.mxu0 0
    %577 = vmatpush1.bf16.msra.mxu0 0
    %578 = vmatprep.subr.bf16.mxu0 0
    %579 = vmatpush1.bf16.msra.mxu0 0
    %580 = vmatprep.subr.bf16.mxu0 0
    %581 = vmatpush1.bf16.msra.mxu0 0
    %582 = vmatprep.mubr.bf16.mxu0 0
    %583 = vmatmul.mubr.bf16.gmra.mrb[0].mxu0 %v478
    %v584 = vpop.f32.mrb[0].mxu0
    %v585 = vadd.f32 %v500, %v584
    %v586 = vpop.f32.mrb[0].mxu0
    %v587 = vpop.f32.mrb[0].mxu0
    %v588 = vpop.f32.mrb[0].mxu0
    %589 = vdwg.mxu0
    %v590 = vmax.f32 %v585, 0.0
    %v591 = vpack.c.bf16 %v590, %v590
    %v592 = vld [vmem:[#allocation11] sm:$0xf]
    %v593 = vld [vmem:[#allocation11 + $0x4] sm:$0xf]
    %v594 = vld [vmem:[#allocation11 + $0x8] sm:$0xf]
    %v595 = vld [vmem:[#allocation11 + $0xc] sm:$0xf]
    %v596 = vld [vmem:[#allocation11 + $0x10] sm:$0xf]
    %v597 = vld [vmem:[#allocation11 + $0x14] sm:$0xf]
    %v598 = vld [vmem:[#allocation11 + $0x18] sm:$0xf]
    %v599 = vld [vmem:[#allocation11 + $0x1c] sm:$0xf]
    %v600 = vld [vmem:[#allocation11 + $0x20] sm:$0xf]
    %v601 = vld [vmem:[#allocation11 + $0x24] sm:$0xf]
    %v602 = vld [vmem:[#allocation11 + $0x28] sm:$0xf]
    %v603 = vld [vmem:[#allocation11 + $0x2c] sm:$0xf]
    %v604 = vld [vmem:[#allocation11 + $0x30] sm:$0xf]
    %v605 = vld [vmem:[#allocation11 + $0x34] sm:$0xf]
    %v606 = vld [vmem:[#allocation11 + $0x38] sm:$0xf]
    %v607 = vld [vmem:[#allocation11 + $0x3c] sm:$0xf]
    %v608 = vld [vmem:[%s10] sm:$0x1]
    %v610 = vlaneseq
    %v611 = vshrl.u32 %v610, 7
    %v612 = vsub.s32 0, %v611
    %v613 = vrot.slane %v608, %v612
    %v631 = vunpack.c.l.b16 %v592
    %v632 = vunpack.c.l.b16 %v593
    %v633 = vunpack.c.l.b16 %v594
    %v634 = vunpack.c.l.b16 %v595
    %v635 = vunpack.c.l.b16 %v596
    %v636 = vunpack.c.l.b16 %v597
    %v637 = vunpack.c.l.b16 %v598
    %v638 = vunpack.c.l.b16 %v599
    %v639 = vunpack.c.l.b16 %v600
    %v640 = vunpack.c.l.b16 %v601
    %v641 = vunpack.c.l.b16 %v602
    %v642 = vunpack.c.l.b16 %v603
    %v643 = vunpack.c.l.b16 %v604
    %v644 = vunpack.c.l.b16 %v605
    %v645 = vunpack.c.l.b16 %v606
    %v646 = vunpack.c.l.b16 %v607
    %v647 = vpack.c.b16 %v632, %v631
    %v648 = vpack.c.b16 %v634, %v633
    %v649 = vpack.c.b16 %v636, %v635
    %v650 = vpack.c.b16 %v638, %v637
    %v651 = vpack.c.b16 %v640, %v639
    %v652 = vpack.c.b16 %v642, %v641
    %v653 = vpack.c.b16 %v644, %v643
    %v654 = vpack.c.b16 %v646, %v645
    %663 = vmatprep.subr.bf16.mxu0 0
    %664 = vmatpush1.bf16.msra.mxu0 %v647
    %665 = vmatprep.subr.bf16.mxu0 0
    %666 = vmatpush1.bf16.msra.mxu0 %v648
    %667 = vmatprep.subr.bf16.mxu0 0
    %668 = vmatpush1.bf16.msra.mxu0 %v649
    %669 = vmatprep.subr.bf16.mxu0 0
    %670 = vmatpush1.bf16.msra.mxu0 %v650
    %671 = vmatprep.subr.bf16.mxu0 0
    %672 = vmatpush1.bf16.msra.mxu0 %v651
    %673 = vmatprep.subr.bf16.mxu0 0
    %674 = vmatpush1.bf16.msra.mxu0 %v652
    %675 = vmatprep.subr.bf16.mxu0 0
    %676 = vmatpush1.bf16.msra.mxu0 %v653
    %677 = vmatprep.subr.bf16.mxu0 0
    %678 = vmatpush1.bf16.msra.mxu0 %v654
    %679 = vmatprep.subr.bf16.mxu0 0
    %680 = vmatpush1.bf16.msra.mxu0 0
    %681 = vmatprep.subr.bf16.mxu0 0
    %682 = vmatpush1.bf16.msra.mxu0 0
    %683 = vmatprep.subr.bf16.mxu0 0
    %684 = vmatpush1.bf16.msra.mxu0 0
    %685 = vmatprep.subr.bf16.mxu0 0
    %686 = vmatpush1.bf16.msra.mxu0 0
    %687 = vmatprep.subr.bf16.mxu0 0
    %688 = vmatpush1.bf16.msra.mxu0 0
    %689 = vmatprep.subr.bf16.mxu0 0
    %690 = vmatpush1.bf16.msra.mxu0 0
    %691 = vmatprep.subr.bf16.mxu0 0
    %692 = vmatpush1.bf16.msra.mxu0 0
    %693 = vmatprep.subr.bf16.mxu0 0
    %694 = vmatpush1.bf16.msra.mxu0 0
    %695 = vmatprep.mubr.bf16.mxu0 0
    %696 = vmatmul.mubr.bf16.gmra.mrb[0].mxu0 %v591
    %v697 = vpop.f32.mrb[0].mxu0
    %v698 = vadd.f32 %v613, %v697
    %v699 = vpop.f32.mrb[0].mxu0
    %v700 = vpop.f32.mrb[0].mxu0
    %v701 = vpop.f32.mrb[0].mxu0
    %702 = vdwg.mxu0
    %v703 = vmax.f32 %v698, 0.0
    %v704 = vpack.c.bf16 %v703, %v703
    %v705 = vld [vmem:[#allocation13] sm:$0xf]
    %v706 = vld [vmem:[#allocation13 + $0x4] sm:$0xf]
    %v707 = vld [vmem:[#allocation13 + $0x8] sm:$0xf]
    %v708 = vld [vmem:[#allocation13 + $0xc] sm:$0xf]
    %v709 = vld [vmem:[#allocation13 + $0x10] sm:$0xf]
    %v710 = vld [vmem:[#allocation13 + $0x14] sm:$0xf]
    %v711 = vld [vmem:[#allocation13 + $0x18] sm:$0xf]
    %v712 = vld [vmem:[#allocation13 + $0x1c] sm:$0xf]
    %v713 = vld [vmem:[#allocation13 + $0x20] sm:$0xf]
    %v714 = vld [vmem:[#allocation13 + $0x24] sm:$0xf]
    %v715 = vld [vmem:[#allocation13 + $0x28] sm:$0xf]
    %v716 = vld [vmem:[#allocation13 + $0x2c] sm:$0xf]
    %v717 = vld [vmem:[#allocation13 + $0x30] sm:$0xf]
    %v718 = vld [vmem:[#allocation13 + $0x34] sm:$0xf]
    %v719 = vld [vmem:[#allocation13 + $0x38] sm:$0xf]
    %v720 = vld [vmem:[#allocation13 + $0x3c] sm:$0xf]
    %v721 = vld [vmem:[%s12] sm:$0x1]
    %v723 = vlaneseq
    %v724 = vshrl.u32 %v723, 7
    %v725 = vsub.s32 0, %v724
    %v726 = vrot.slane %v721, %v725
    %v744 = vunpack.c.l.b16 %v705
    %v745 = vunpack.c.l.b16 %v706
    %v746 = vunpack.c.l.b16 %v707
    %v747 = vunpack.c.l.b16 %v708
    %v748 = vunpack.c.l.b16 %v709
    %v749 = vunpack.c.l.b16 %v710
    %v750 = vunpack.c.l.b16 %v711
    %v751 = vunpack.c.l.b16 %v712
    %v752 = vunpack.c.l.b16 %v713
    %v753 = vunpack.c.l.b16 %v714
    %v754 = vunpack.c.l.b16 %v715
    %v755 = vunpack.c.l.b16 %v716
    %v756 = vunpack.c.l.b16 %v717
    %v757 = vunpack.c.l.b16 %v718
    %v758 = vunpack.c.l.b16 %v719
    %v759 = vunpack.c.l.b16 %v720
    %v760 = vpack.c.b16 %v745, %v744
    %v761 = vpack.c.b16 %v747, %v746
    %v762 = vpack.c.b16 %v749, %v748
    %v763 = vpack.c.b16 %v751, %v750
    %v764 = vpack.c.b16 %v753, %v752
    %v765 = vpack.c.b16 %v755, %v754
    %v766 = vpack.c.b16 %v757, %v756
    %v767 = vpack.c.b16 %v759, %v758
    %776 = vmatprep.subr.bf16.mxu0 0
    %777 = vmatpush1.bf16.msra.mxu0 %v760
    %778 = vmatprep.subr.bf16.mxu0 0
    %779 = vmatpush1.bf16.msra.mxu0 %v761
    %780 = vmatprep.subr.bf16.mxu0 0
    %781 = vmatpush1.bf16.msra.mxu0 %v762
    %782 = vmatprep.subr.bf16.mxu0 0
    %783 = vmatpush1.bf16.msra.mxu0 %v763
    %784 = vmatprep.subr.bf16.mxu0 0
    %785 = vmatpush1.bf16.msra.mxu0 %v764
    %786 = vmatprep.subr.bf16.mxu0 0
    %787 = vmatpush1.bf16.msra.mxu0 %v765
    %788 = vmatprep.subr.bf16.mxu0 0
    %789 = vmatpush1.bf16.msra.mxu0 %v766
    %790 = vmatprep.subr.bf16.mxu0 0
    %791 = vmatpush1.bf16.msra.mxu0 %v767
    %792 = vmatprep.subr.bf16.mxu0 0
    %793 = vmatpush1.bf16.msra.mxu0 0
    %794 = vmatprep.subr.bf16.mxu0 0
    %795 = vmatpush1.bf16.msra.mxu0 0
    %796 = vmatprep.subr.bf16.mxu0 0
    %797 = vmatpush1.bf16.msra.mxu0 0
    %798 = vmatprep.subr.bf16.mxu0 0
    %799 = vmatpush1.bf16.msra.mxu0 0
    %800 = vmatprep.subr.bf16.mxu0 0
    %801 = vmatpush1.bf16.msra.mxu0 0
    %802 = vmatprep.subr.bf16.mxu0 0
    %803 = vmatpush1.bf16.msra.mxu0 0
    %804 = vmatprep.subr.bf16.mxu0 0
    %805 = vmatpush1.bf16.msra.mxu0 0
    %806 = vmatprep.subr.bf16.mxu0 0
    %807 = vmatpush1.bf16.msra.mxu0 0
    %808 = vmatprep.mubr.bf16.mxu0 0
    %809 = vmatmul.mubr.bf16.gmra.mrb[0].mxu0 %v704
    %v810 = vpop.f32.mrb[0].mxu0
    %v811 = vadd.f32 %v726, %v810
    %v812 = vpop.f32.mrb[0].mxu0
    %v813 = vpop.f32.mrb[0].mxu0
    %v814 = vpop.f32.mrb[0].mxu0
    %815 = vdwg.mxu0
    %816 = vst [vmem:[#allocation14] sm:$0xff] %v811
    // Predicated region
    $region82: #{tpu_custom_call.1} parent=1 // pred_check
      _
    $region83: #{tpu_custom_call.1} parent=1 // pred_check_branch
      %818 = sbr.rel (0) target = $region85
    $region84: #{tpu_custom_call.1} parent=1 // pred_region
      %s820 = ssub.s32 128, 128
      %821 = vsyncadd [#allocation4], %s820
      %s823 = sshll.u32 [#allocation14], 4
      %s824 = int_to_ptr.vmem [resolvable:$true] %s823
      %826 = dma.vmem_to_hbm [thread:$0]  %s824, 128, %s13, [#allocation4]
    $region85: #{tpu_custom_call.1} parent=1 // pred_fallthru
      _
    // Predicated region
    $region86: #{tpu_custom_call.1} parent=1 // pred_check
      _
    $region87: #{tpu_custom_call.1} parent=1 // pred_check_branch
      %828 = sbr.rel (0) target = $region89
    $region88: #{tpu_custom_call.1} parent=1 // pred_region
      %829 = dma.done [#allocation4], 128
    $region89: #{tpu_custom_call.1} parent=1 // pred_fallthru
      _
    %830 = vsyncpa [#allocation3], 1
    %831 = vsyncpa [#allocation6], 1
    %832 = vsyncpa [#allocation9], 1
    %833 = vsyncpa [#allocation12], 1
    %834 = vsyncpa [#allocation4], 1

</llo_original>
